<compile_context>
chip_gen: v7x
topology: tpu7x:2x2x1
jax: 0.10.0
libtpu: 0.0.40
codegen_flags: <defaults>
</compile_context>

<pallas_src>
import jax
import jax.numpy as jnp
from jax.experimental import pallas as pl
from jax.experimental.pallas import tpu as pltpu


def _s2_normalize_kernel(med_ref, inv_scale_ref, x_ref, o_ref):
    # med_ref / inv_scale_ref: SMEM (C,) float32 scalar-prefetch refs.
    # x_ref: (1, block_rows, LANE) input block for channel c = program_id(0).
    # o_ref: (1, block_rows, LANE) output block.
    c = pl.program_id(0)
    m = med_ref[c]
    s_inv = inv_scale_ref[c]
    x = x_ref[...].astype(jnp.float32)
    o_ref[...] = ((x - m) * s_inv).astype(o_ref.dtype)


def _choose_lane(n):
    """Largest lane width in {1024, 512, 256, 128} that divides n (else 128 + pad)."""
    for lane in (1024, 512, 256, 128):
        if n % lane == 0:
            return lane
    return 128


def s2_normalize(x, med, scale, *, out_dtype=jnp.float32,
                 target_block_bytes=2 * 1024 * 1024):
    """Pallas implementation of S2Normalize.forward (s2_partial=False).

    Args:
      x:     (C, T, H, W) array (any real dtype; cast to float inside kernel).
      med:   (C,) per-channel mean (torchvision Normalize `mean`).
      scale: (C,) per-channel std  (torchvision Normalize `std`).
      out_dtype: output dtype (float32 matches the PyTorch module; bfloat16
        halves HBM write traffic but changes semantics).
      target_block_bytes: approximate per-array VMEM block size.

    Returns:
      (C, T, H, W) array of dtype `out_dtype`.
    """
    C, T, H, W = x.shape
    N = T * H * W

    med = jnp.asarray(med, dtype=jnp.float32)
    inv_scale = 1.0 / jnp.asarray(scale, dtype=jnp.float32)

    # Lane-dense view: (C, rows, LANE) with LANE a multiple of 128.
    lane = _choose_lane(N)
    n_pad = pl.cdiv(N, lane) * lane
    x2 = x.reshape(C, N)
    if n_pad != N:
        x2 = jnp.pad(x2, ((0, 0), (0, n_pad - N)))
    rows = n_pad // lane
    x3 = x2.reshape(C, rows, lane)

    # Row-block size: ~target_block_bytes of f32 output per grid step,
    # multiple of 8 (sublane) unless a single block covers all rows.
    target_rows = max(8, target_block_bytes // (4 * lane))
    if rows <= target_rows:
        block_rows = rows
    else:
        block_rows = (target_rows // 8) * 8
    num_row_blocks = pl.cdiv(rows, block_rows)

    grid_spec = pltpu.PrefetchScalarGridSpec(
        num_scalar_prefetch=2,
        grid=(C, num_row_blocks),
        in_specs=[
            pl.BlockSpec((1, block_rows, lane),
                         lambda c, r, med_r, inv_r: (c, r, 0)),
        ],
        out_specs=pl.BlockSpec((1, block_rows, lane),
                               lambda c, r, med_r, inv_r: (c, r, 0)),
    )

    out3 = pl.pallas_call(
        _s2_normalize_kernel,
        out_shape=jax.ShapeDtypeStruct((C, rows, lane), out_dtype),
        grid_spec=grid_spec,
        compiler_params=pltpu.CompilerParams(
            dimension_semantics=("parallel", "parallel"),
        ),
    )(med, inv_scale, x3)

    out = out3.reshape(C, n_pad)
    if n_pad != N:
        out = out[:, :N]
    return out.reshape(C, T, H, W)

    # TODO(synk): s2_partial=True branch (normalize only the first len(S2_BAND)
    # channels, pass trailing channels through) — equivalent to setting
    # med=0, scale=1 for the trailing channels; not exercised here.
    # TODO(synk): for tiny inputs (< a few vreg pages) a single-grid-step path
    # with med/scale broadcast from a (C,1,1) VMEM input would shave ~1 µs of
    # per-step overhead; skipped for simplicity.


def s2_normalize_ref(x, med, scale):
    """Pure-JAX reference matching the PyTorch module (uses a true divide)."""
    x = x.astype(jnp.float32)
    med = jnp.asarray(med, jnp.float32).reshape(-1, 1, 1, 1)
    scale = jnp.asarray(scale, jnp.float32).reshape(-1, 1, 1, 1)
    return (x - med) / scale


if __name__ == "__main__":
    key = jax.random.PRNGKey(0)
    C, T, H, W = 4, 8, 16, 16   # (channels, time, height, width)

    k1, k2, k3 = jax.random.split(key, 3)
    # Simulate raw S2 reflectance-like values.
    x = jax.random.uniform(k1, (C, T, H, W), dtype=jnp.float32,
                           minval=0.0, maxval=10000.0)
    med = jax.random.uniform(k2, (C,), dtype=jnp.float32,
                             minval=100.0, maxval=2000.0)
    scale = jax.random.uniform(k3, (C,), dtype=jnp.float32,
                               minval=500.0, maxval=3000.0)

    out = jax.block_until_ready(s2_normalize(x, med, scale))
    ref = s2_normalize_ref(x, med, scale)
    assert out.shape == (C, T, H, W)
    assert out.dtype == jnp.float32
    # reciprocal-multiply vs divide differs by a couple of ulps -> slightly
    # looser tolerance than exact equality.
    assert jnp.allclose(out, ref, rtol=1e-5, atol=1e-5), "mismatch vs reference"

    # Second case exercising the lane-padding path (T*H*W not divisible by 128).
    C2, T2, H2, W2 = 3, 2, 5, 7
    xb = jax.random.uniform(jax.random.PRNGKey(1), (C2, T2, H2, W2),
                            dtype=jnp.float32, minval=0.0, maxval=10000.0)
    out_b = jax.block_until_ready(s2_normalize(xb, med[:C2], scale[:C2]))
    ref_b = s2_normalize_ref(xb, med[:C2], scale[:C2])
    assert out_b.shape == (C2, T2, H2, W2)
    assert jnp.allclose(out_b, ref_b, rtol=1e-5, atol=1e-5), "mismatch (padded path)"

    print("KERNEL_OK")
</pallas_src>

<mosaic_0001>
module attributes {stable_mosaic.version = 11 : i64} {
  func.func @_s2_normalize_kernel(%arg0: i32, %arg1: i32, %arg2: memref<4xf32, #tpu.memory_space<smem>>, %arg3: memref<4xf32, #tpu.memory_space<smem>>, %arg4: memref<1x2x1024xf32, #tpu.memory_space<vmem>>, %arg5: memref<1x2x1024xf32, #tpu.memory_space<vmem>>) attributes {dimension_semantics = [#tpu.dimension_semantics<parallel>, #tpu.dimension_semantics<parallel>], iteration_bounds = array<i64: 4, 1>, scalar_prefetch = 2 : i64, scratch_operands = 0 : i64, tpu.core_type = #tpu.core_type<tc>, window_params = [{transform_indices = @transform_0, window_bounds = array<i64: 1, 2, 1024>}, {transform_indices = @transform_1, window_bounds = array<i64: 1, 2, 1024>}]} {
    %0 = arith.index_cast %arg0 : i32 to index
    %1 = memref.load %arg2[%0] : memref<4xf32, #tpu.memory_space<smem>>
    %2 = arith.index_cast %arg0 : i32 to index
    %3 = memref.load %arg3[%2] : memref<4xf32, #tpu.memory_space<smem>>
    %c0 = arith.constant 0 : index
    %c0_0 = arith.constant 0 : index
    %c0_1 = arith.constant 0 : index
    %4 = vector.load %arg4[%c0, %c0_0, %c0_1] : memref<1x2x1024xf32, #tpu.memory_space<vmem>>, vector<1x2x1024xf32>
    %5 = vector.broadcast %1 : f32 to vector<1x2x1024xf32>
    %6 = arith.subf %4, %5 : vector<1x2x1024xf32>
    %7 = vector.broadcast %3 : f32 to vector<1x2x1024xf32>
    %8 = arith.mulf %6, %7 : vector<1x2x1024xf32>
    %c0_2 = arith.constant 0 : index
    %c0_3 = arith.constant 0 : index
    %c0_4 = arith.constant 0 : index
    %9 = vector.load %arg5[%c0_2, %c0_3, %c0_4] : memref<1x2x1024xf32, #tpu.memory_space<vmem>>, vector<1x2x1024xf32>
    tpu.vector_store %arg5[%c0_2, %c0_3, %c0_4], %8 {strides = array<i32>} : memref<1x2x1024xf32, #tpu.memory_space<vmem>>, vector<1x2x1024xf32>,
    return
  }
  func.func @transform_0(%arg0: i32, %arg1: i32, %arg2: memref<4xf32, #tpu.memory_space<smem>>, %arg3: memref<4xf32, #tpu.memory_space<smem>>) -> (i32, i32, i32) {
    %c0_i32 = arith.constant 0 : i32
    %c0_i32_0 = arith.constant 0 : i32
    return %arg0, %arg1, %c0_i32 : i32, i32, i32
  }
  func.func @transform_1(%arg0: i32, %arg1: i32, %arg2: memref<4xf32, #tpu.memory_space<smem>>, %arg3: memref<4xf32, #tpu.memory_space<smem>>) -> (i32, i32, i32) {
    %c0_i32 = arith.constant 0 : i32
    %c0_i32_0 = arith.constant 0 : i32
    return %arg0, %arg1, %c0_i32 : i32, i32, i32
  }
}

</mosaic_0001>

<llo_original>
// kernel: tpu_custom_call.1
$region0: #{tpu_custom_call.1}
  #allocation0 [shape = 'u32[]', space=smem, size = 0x4, offset = 0x4, fixed_abs, tag = 'smem constant byte address 0x4 - core index']
  #allocation1 [shape = 'u32[144,128]{1,0:T(1,128)}', space=vmem, size = 0x12000, scoped, tag = 'internal scratch']
  #allocation2 [shape = 's32[1]{0}', space=sflag, size = 0x4, scoped, tag = 'scoped memory for tpu_custom_call.1']
  #allocation3 [shape = 'u8[512]{0}', space=smem, size = 0x200, scoped, tag = 'prefetched SMEM operand 0']
  #allocation4 [shape = 'u8[512]{0}', space=smem, size = 0x200, scoped, tag = 'prefetched SMEM operand 1']
  %s0 = inlined_call_operand.hbm [shape: f32[4], index: 0, kind: input, shape index: {}]
  %s1 = inlined_call_operand.vmem [shape: f32[4], index: 1, kind: input, shape index: {}]
  %s2 = inlined_call_operand.hbm [shape: f32[4,2,1024], index: 2, kind: input, shape index: {}]
  %s3 = inlined_call_operand.hbm [shape: f32[4,2,1024], index: 3, kind: output, shape index: {}]
  %s4 = sld [smem:[#allocation0]]
  $region41: #{tpu_custom_call.1} parent=0
    _
  %s6 = ssub.s32 1, %s4
  %s7 = scalar_select 0, %s6, %s4
  %9 = dma.hbm_to_smem %s0, 16, [#allocation3], [#allocation2]
  %s10 = sshll.u32 %s1, 4
  %s11 = int_to_ptr.vmem [resolvable:$true] %s10
  %13 = dma.vmem_to_smem %s11, 16, [#allocation4], [#allocation2]
  %14 = dma.done [#allocation2], 32
  %15 = sfence
  $region1: #{tpu_custom_call.1} parent=0
    #allocation5 [shape = 'u8[16384]{0}', space=vmem, size = 0x4000, scoped, tag = 'input window, operand 2']
    #allocation6 [shape = 's32[2]{0}', space=sflag, size = 0x8, scoped, tag = 'scoped memory for tpu_custom_call.1']
    #allocation7 [shape = 's32[2]{0}', space=sflag, size = 0x8, scoped, tag = 'scoped memory for tpu_custom_call.1']
    #allocation8 [shape = 'u8[16384]{0}', space=vmem, size = 0x4000, scoped, tag = 'output window, operand 0']
    %16 = vsyncpa [#allocation6], 0
    %s17 = scalar_lea.sflag [#allocation6], 1
    %18 = vsyncpa %s17, 0
    %19 = vsyncpa [#allocation7], 0
    %s20 = scalar_lea.sflag [#allocation7], 1
    %21 = vsyncpa %s20, 0
    loop: start=0, step=1, limit=6
    $region2: #{tpu_custom_call.1} parent=1 // loop_pre_header
      _
    $region3: #{tpu_custom_call.1} parent=1 // loop_header
      %s23 = sphi 0, %s27
      %p24 = scmp.ge.s32.totalorder %s23, 6
      %s30 = sphi 0, %s42
      %s31 = sphi 0, %s38
      %s32 = sphi 0, %s30
      %s33 = sphi 0, %s31
      %s34 = sphi 0, %s32
      %s35 = sphi 0, %s33
      %s47 = sphi 0, %s49
      %s50 = sphi 0, %s47
      %s51 = sphi 0, %s50
      %s67 = sphi 0, %s51
      %s75 = sphi 0, %s77
      %s78 = sphi 0, %s75
      %s79 = sphi 0, %s78
      %s95 = sphi 0, %s79
    $region4: #{tpu_custom_call.1} parent=1 // loop_header_branch
      %26 = sbr.rel (%p24) target = $region8
    $region5: #{tpu_custom_call.1} parent=1 // loop_body
      %s28 = ssub.s32 %s23, 1
      %s29 = ssub.s32 %s23, 2
      %s36 = sadd.s32 1, %s31
      %p37 = scmp.ge.s32.totalorder %s36, 1
      %s38 = scalar_select %p37, 0, %s36
      %s39 = sadd.s32 1, %s30
      %s40 = scalar_select %p37, %s39, %s30
      %p41 = scmp.ge.s32.totalorder %s40, 4
      %s42 = scalar_select %p41, 0, %s40
      %s43 = ssub.s32 %s30, %s42
      %s44 = ssub.s32 %s31, %s38
      %s45 = sor.u32 %s43, %s44
      %p46 = scmp.eq.s32.totalorder %s45, 0
      %s48 = sadd.s32 %s47, 1
      %s49 = scalar_select %p46, %s47, %s48
      %p52 = pneg %p46
      %p53 = scmp.eq.s32.totalorder %s23, 3
      %p54 = por %p52, %p53
      %p55 = scmp.ne.s32.totalorder %s47, %s50
      %p56 = scmp.eq.s32.totalorder %s23, 0
      %p57 = por %p55, %p56
      %p58 = scmp.ne.s32.totalorder %s47, %s50
      %p59 = scmp.eq.s32.totalorder %s28, 3
      %p60 = por %p58, %p59
      %p61 = scmp.ne.s32.totalorder %s50, %s51
      %p62 = scmp.eq.s32.totalorder %s28, 0
      %p63 = por %p61, %p62
      %p64 = scmp.ne.s32.totalorder %s50, %s51
      %p65 = scmp.eq.s32.totalorder %s29, 3
      %p66 = por %p64, %p65
      %p68 = scmp.ne.s32.totalorder %s51, %s67
      %p69 = scmp.eq.s32.totalorder %s29, 0
      %p70 = por %p68, %p69
      %s71 = ssub.s32 %s30, %s42
      %s72 = ssub.s32 %s31, %s38
      %s73 = sor.u32 %s71, %s72
      %p74 = scmp.eq.s32.totalorder %s73, 0
      %s76 = sadd.s32 %s75, 1
      %s77 = scalar_select %p74, %s75, %s76
      %p80 = pneg %p74
      %p81 = scmp.eq.s32.totalorder %s23, 3
      %p82 = por %p80, %p81
      %p83 = scmp.ne.s32.totalorder %s75, %s78
      %p84 = scmp.eq.s32.totalorder %s23, 0
      %p85 = por %p83, %p84
      %p86 = scmp.ne.s32.totalorder %s75, %s78
      %p87 = scmp.eq.s32.totalorder %s28, 3
      %p88 = por %p86, %p87
      %p89 = scmp.ne.s32.totalorder %s78, %s79
      %p90 = scmp.eq.s32.totalorder %s28, 0
      %p91 = por %p89, %p90
      %p92 = scmp.ne.s32.totalorder %s78, %s79
      %p93 = scmp.eq.s32.totalorder %s29, 3
      %p94 = por %p92, %p93
      %p96 = scmp.ne.s32.totalorder %s79, %s95
      %p97 = scmp.eq.s32.totalorder %s29, 0
      %p98 = por %p96, %p97
      %p99 = scmp.le.s32.totalorder 1, %s23
      %p100 = scmp.lt.s32.totalorder %s23, 5
      %p101 = pnand %p99, %p100
      %p102 = pneg %p101
      // Predicated region
      $region9: #{tpu_custom_call.1} parent=5 // pred_check
        _
      $region10: #{tpu_custom_call.1} parent=5 // pred_check_branch
        %104 = sbr.rel (%p101) target = $region12
      $region11: #{tpu_custom_call.1} parent=5 // pred_region
        %s105 = ssub.s32 %s23, 1
      $region12: #{tpu_custom_call.1} parent=5 // pred_fallthru
        _
      %p106 = scmp.lt.s32.totalorder %s23, 4
      // Predicated region
      $region13: #{tpu_custom_call.1} parent=5 // pred_check
        %p107 = pneg %p106
      $region14: #{tpu_custom_call.1} parent=5 // pred_check_branch
        %109 = sbr.rel (%p107) target = $region16
      $region15: #{tpu_custom_call.1} parent=5 // pred_region
        // Predicated region
        $region17: #{tpu_custom_call.1} parent=15 // pred_check
          %p110 = pneg %p57
        $region18: #{tpu_custom_call.1} parent=15 // pred_check_branch
          %112 = sbr.rel (%p110) target = $region20
        $region19: #{tpu_custom_call.1} parent=15 // pred_region
          %s113 = sand.u32 %s47, 1
          %s114 = scalar_lea.sflag [#allocation6], %s113
          %s115 = sand.u32 %s47, 1
          %s116 = smul.addr %s115, 16
          %s117 = scalar_lea.vmem [#allocation5], %s116
          %s119 = ssub.s32 256, 256
          %120 = vsyncadd %s114, %s119
          %s121 = smul.addr %s31, 8
          %s122 = smul.addr %s30, 8
          %s123 = sadd.s32 %s121, %s122
          %s124 = smul.addr %s123, 32
          %s125 = scalar_lea.hbm %s2, %s124
          %s127 = sshll.u32 %s117, 4
          %s128 = int_to_ptr.vmem [resolvable:$true] %s127
          %130 = dma.hbm_to_vmem [thread:$0]  %s125, 256, %s128, %s114
        $region20: #{tpu_custom_call.1} parent=15 // pred_fallthru
          _
      $region16: #{tpu_custom_call.1} parent=5 // pred_fallthru
        _
      %p131 = scmp.le.s32.totalorder 1, %s23
      %p132 = scmp.lt.s32.totalorder %s23, 5
      %p133 = pnand %p131, %p132
      %p134 = pneg %p133
      // Predicated region
      $region21: #{tpu_custom_call.1} parent=5 // pred_check
        _
      $region22: #{tpu_custom_call.1} parent=5 // pred_check_branch
        %136 = sbr.rel (%p133) target = $region24
      $region23: #{tpu_custom_call.1} parent=5 // pred_region
        %s137 = ssub.s32 %s23, 1
        %s138 = sand.u32 %s50, 1
        %s139 = scalar_lea.sflag [#allocation6], %s138
        %s140 = sand.u32 %s50, 1
        %s141 = smul.addr %s140, 16
        %s142 = scalar_lea.vmem [#allocation5], %s141
        // Predicated region
        $region25: #{tpu_custom_call.1} parent=23 // pred_check
          %p143 = pneg %p63
        $region26: #{tpu_custom_call.1} parent=23 // pred_check_branch
          %145 = sbr.rel (%p143) target = $region28
        $region27: #{tpu_custom_call.1} parent=23 // pred_region
          %146 = dma.done %s139, 256
        $region28: #{tpu_custom_call.1} parent=23 // pred_fallthru
          _
        %s147 = sand.u32 %s50, 1
        %s148 = scalar_lea.sflag [#allocation6], %s147
        %s149 = sand.u32 %s50, 1
        %s150 = smul.addr %s149, 16
        %s151 = scalar_lea.vmem [#allocation5], %s150
        %p152 = pneg %p63
        %p153 = pneg %p60
        %p154 = pneg %p91
        %p155 = pneg %p88
        %s156 = sand.u32 %s78, 1
        %s157 = scalar_lea.sflag [#allocation7], %s156
        %s158 = sand.u32 %s78, 1
        %s159 = smul.addr %s158, 16
        %s160 = scalar_lea.vmem [#allocation8], %s159
        %s161 = sld [smem:[#allocation3 + %s32]]
        %s162 = sld [smem:[#allocation4 + %s32]]
        %v163 = vld [vmem:[%s142] sm:$0xff]
        %v164 = vld [vmem:[%s142 + $0x8] sm:$0xff]
        %v165 = vstv %s161
        %v166 = vsub.f32 %v163, %v165
        %v167 = vsub.f32 %v164, %v165
        %v168 = vstv %s162
        %v169 = vmul.f32 %v166, %v168
        %v170 = vmul.f32 %v167, %v168
        %171 = vst [vmem:[%s160] sm:$0xff] %v169
        %172 = vst [vmem:[%s160 + $0x8] sm:$0xff] %v170
        %s173 = sand.u32 %s78, 1
        %s174 = scalar_lea.sflag [#allocation7], %s173
        %s175 = sand.u32 %s78, 1
        %s176 = smul.addr %s175, 16
        %s177 = scalar_lea.vmem [#allocation8], %s176
        // Predicated region
        $region29: #{tpu_custom_call.1} parent=23 // pred_check
          %p178 = pneg %p88
        $region30: #{tpu_custom_call.1} parent=23 // pred_check_branch
          %180 = sbr.rel (%p178) target = $region32
        $region31: #{tpu_custom_call.1} parent=23 // pred_region
          %s182 = ssub.s32 256, 256
          %183 = vsyncadd %s174, %s182
          %s184 = smul.addr %s33, 8
          %s185 = smul.addr %s32, 8
          %s186 = sadd.s32 %s184, %s185
          %s187 = smul.addr %s186, 32
          %s188 = scalar_lea.hbm %s3, %s187
          %s190 = sshll.u32 %s177, 4
          %s191 = int_to_ptr.vmem [resolvable:$true] %s190
          %193 = dma.vmem_to_hbm [thread:$0]  %s191, 256, %s188, %s174
        $region32: #{tpu_custom_call.1} parent=23 // pred_fallthru
          _
      $region24: #{tpu_custom_call.1} parent=5 // pred_fallthru
        _
      %p194 = scmp.le.s32.totalorder 2, %s23
      // Predicated region
      $region33: #{tpu_custom_call.1} parent=5 // pred_check
        %p195 = pneg %p194
      $region34: #{tpu_custom_call.1} parent=5 // pred_check_branch
        %197 = sbr.rel (%p195) target = $region36
      $region35: #{tpu_custom_call.1} parent=5 // pred_region
        %s198 = ssub.s32 %s23, 2
        // Predicated region
        $region37: #{tpu_custom_call.1} parent=35 // pred_check
          %p199 = pneg %p94
        $region38: #{tpu_custom_call.1} parent=35 // pred_check_branch
          %201 = sbr.rel (%p199) target = $region40
        $region39: #{tpu_custom_call.1} parent=35 // pred_region
          %s202 = sand.u32 %s79, 1
          %s203 = scalar_lea.sflag [#allocation7], %s202
          %s204 = sand.u32 %s79, 1
          %s205 = smul.addr %s204, 16
          %s206 = scalar_lea.vmem [#allocation8], %s205
          %207 = dma.done %s203, 256
        $region40: #{tpu_custom_call.1} parent=35 // pred_fallthru
          _
      $region36: #{tpu_custom_call.1} parent=5 // pred_fallthru
        _
    $region6: #{tpu_custom_call.1} parent=1 // loop_footer
      %s27 = sadd.s32 1, %s23
    $region7: #{tpu_custom_call.1} parent=1 // loop_footer_branch
      %22 = sbr.rel target = $region3
    $region8: #{tpu_custom_call.1} parent=1 // loop_exit
      _
    %208 = vsyncpa [#allocation6], 1
    %s209 = scalar_lea.sflag [#allocation6], 1
    %210 = vsyncpa %s209, 1
    %211 = vsyncpa [#allocation7], 1
    %s212 = scalar_lea.sflag [#allocation7], 1
    %213 = vsyncpa %s212, 1

</llo_original>
